<compile_context>
chip_gen: v7x
topology: tpu7x:2x2x1
jax: 0.10.0
libtpu: 0.0.40
codegen_flags: <defaults>
</compile_context>

<pallas_src>
import jax
import jax.numpy as jnp
from jax.experimental import pallas as pl
from jax.experimental.pallas import tpu as pltpu

_LANES = 128
_MAX_LANE_WIDTH = 8192
_SMALL_BYTES = 512 << 10          # whole-array (no-grid) path at/below this
_RAGGED_WHOLE_BYTES = 2 << 20     # ragged totals at/below this: one whole-array block
_DEFAULT_BLOCK_BYTES = 4 << 20    # per-operand block cap (3 streams x 2 bufs = 24 MiB VMEM)
_DEFAULT_VMEM_LIMIT = 32 << 20


def _sigma_kernel(x_ref, var_ref, o_ref):
    # Elementwise multiply on the VPU: Sigma(x) = x * diagonalVariance
    o_ref[...] = x_ref[...] * var_ref[...]


def _select_caps():
    """Generation-gated block / scoped-VMEM caps.

    4 MiB blocks + 32 MiB scoped VMEM are safe on every generation (v7x has only
    64 MiB physical VMEM per TC).  Chips with 128 MiB physical VMEM (v5e/v6e) can
    afford 8 MiB blocks and a 64 MiB scoped limit, halving grid-step overhead.
    """
    max_block, vmem_limit = _DEFAULT_BLOCK_BYTES, _DEFAULT_VMEM_LIMIT
    try:
        info = pltpu.get_tpu_info()
        phys = getattr(info, "vmem_capacity_bytes", None)
        if phys is not None and phys >= (96 << 20):
            max_block, vmem_limit = 8 << 20, 64 << 20
    except Exception:
        pass
    return max_block, vmem_limit


def _round_up(n, m):
    return -(-n // m) * m


def _choose_lanes(total):
    """Largest power-of-2 lane width in [128, 8192] dividing total, or None (ragged)."""
    c = _MAX_LANE_WIDTH
    while c >= _LANES:
        if total % c == 0:
            return c
        c //= 2
    return None


def _choose_tile_rows(rows, lanes, itemsize, max_block_bytes):
    """tile_rows from the byte cap only (cdiv grid handles the ragged last block)."""
    cap = max(8, (max_block_bytes // (lanes * itemsize)) // 8 * 8)
    tile_rows = cap
    grid_len = pl.cdiv(rows, tile_rows)
    # Prefer an even grid (>= 2) so the single "parallel" axis splits evenly across
    # the two TensorCores on v7x (no-op on single-TC v5e/v6e). Only bother when the
    # grid is small enough for the imbalance to matter.
    if grid_len % 2 == 1 and grid_len <= 7 and rows >= 16:
        tile_rows = _round_up(pl.cdiv(rows, grid_len + 1), 8)
    return tile_rows


def _sigma_whole_array(x, v):
    """Single whole-array block in VMEM, no grid — for small inputs."""
    return pl.pallas_call(
        _sigma_kernel,
        out_shape=jax.ShapeDtypeStruct(x.shape, x.dtype),
        compiler_params=pltpu.CompilerParams(vmem_limit_bytes=_DEFAULT_VMEM_LIMIT),
    )(x, v)


def _sigma_tiled(x2d, v2d, tile_rows, vmem_limit):
    """Tiled, auto-pipelined elementwise multiply over a lane-dense 2D view."""
    rows, lanes = x2d.shape
    itemsize = jnp.dtype(x2d.dtype).itemsize
    total_bytes = rows * lanes * itemsize
    grid_len = pl.cdiv(rows, tile_rows)
    return pl.pallas_call(
        _sigma_kernel,
        out_shape=jax.ShapeDtypeStruct((rows, lanes), x2d.dtype),
        grid=(grid_len,),
        in_specs=[
            pl.BlockSpec((tile_rows, lanes), lambda i: (i, 0)),
            pl.BlockSpec((tile_rows, lanes), lambda i: (i, 0)),
        ],
        out_specs=pl.BlockSpec((tile_rows, lanes), lambda i: (i, 0)),
        compiler_params=pltpu.CompilerParams(
            dimension_semantics=("parallel",),
            vmem_limit_bytes=vmem_limit,
        ),
        cost_estimate=pl.CostEstimate(
            flops=rows * lanes,
            transcendentals=0,
            bytes_accessed=3 * total_bytes,
        ),
    )(x2d, v2d)


def _sigma_ragged(x, v):
    """total % 128 != 0: no zero-copy lane-dense 2D view exists."""
    total = x.size
    itemsize = jnp.dtype(x.dtype).itemsize
    x_flat = jnp.ravel(x)      # free for contiguous arrays
    v_flat = jnp.ravel(v)
    if total * itemsize <= _RAGGED_WHOLE_BYTES:
        out = _sigma_whole_array(x_flat.reshape(1, total), v_flat.reshape(1, total))
        return out.reshape(x.shape)
    # Body + tail split: the 1024-aligned bulk takes the lane-dense tiled path; the
    # < 1024-element remainder runs as one whole-array block.
    # TODO(synk): the prefix slices / final concatenate still materialize copies; a
    # masked-tail 1D grid over the flat array would make this path fully zero-copy.
    bulk = (total // 1024) * 1024
    out_bulk = diagonal_noise_covariance_forward(x_flat[:bulk], v_flat[:bulk])
    tail = total - bulk
    out_tail = _sigma_whole_array(
        x_flat[bulk:].reshape(1, tail), v_flat[bulk:].reshape(1, tail)
    ).reshape(tail)
    return jnp.concatenate([out_bulk, out_tail]).reshape(x.shape)


def diagonal_noise_covariance_forward(x, diagonal_variance):
    """Pallas implementation of DiagonalNoiseCovariance.forward (== Sigma(x) = x * diagonalVariance)."""
    if x.shape != diagonal_variance.shape:
        raise ValueError("x and diagonal_variance must have identical shapes")
    if x.dtype != diagonal_variance.dtype:
        raise ValueError("x and diagonal_variance must have identical dtypes")

    total = x.size
    itemsize = jnp.dtype(x.dtype).itemsize
    total_bytes = total * itemsize
    max_block_bytes, vmem_limit = _select_caps()

    lanes = _choose_lanes(total)
    if lanes is None:
        return _sigma_ragged(x, diagonal_variance)

    rows = total // lanes
    if total_bytes <= _SMALL_BYTES or rows < 16:
        # Tiny / very-short inputs: a grid is pure launch/DMA overhead — one VMEM block.
        shape2d = (total // _LANES, _LANES)
        out2d = _sigma_whole_array(x.reshape(shape2d), diagonal_variance.reshape(shape2d))
        return out2d.reshape(x.shape)

    tile_rows = _choose_tile_rows(rows, lanes, itemsize, max_block_bytes)
    out2d = _sigma_tiled(
        x.reshape(rows, lanes), diagonal_variance.reshape(rows, lanes), tile_rows, vmem_limit
    )
    return out2d.reshape(x.shape)


if __name__ == "__main__":
    key = jax.random.PRNGKey(0)
    k1, k2, k3, k4, k5, k6, k7, k8 = jax.random.split(key, 8)

    # Small NCHW input consistent with an image-space measurement model
    # (exercises the whole-array, no-grid path).
    x_small = jax.random.normal(k1, (2, 4, 16, 16), dtype=jnp.float32)
    var_small = jax.random.uniform(k2, (2, 4, 16, 16), dtype=jnp.float32) + 0.5
    out_small = jax.block_until_ready(diagonal_noise_covariance_forward(x_small, var_small))
    ref_small = x_small * var_small
    assert out_small.shape == ref_small.shape and out_small.dtype == ref_small.dtype
    assert jnp.allclose(out_small, ref_small, rtol=1e-6, atol=1e-6)

    # Larger NCHW input: tiled, lane-dense pipelined path with an even grid (>= 2).
    x_big = jax.random.normal(k3, (8, 8, 128, 128), dtype=jnp.float32)
    var_big = jax.random.uniform(k4, (8, 8, 128, 128), dtype=jnp.float32) + 0.5
    out_big = jax.block_until_ready(diagonal_noise_covariance_forward(x_big, var_big))
    ref_big = x_big * var_big
    assert out_big.shape == ref_big.shape and out_big.dtype == ref_big.dtype
    assert jnp.allclose(out_big, ref_big, rtol=1e-6, atol=1e-6)

    # Rows not divisible by tile_rows: exercises the cdiv grid with a masked last block.
    x_rag = jax.random.normal(k5, (1, 3, 200, 1024), dtype=jnp.float32)
    var_rag = jax.random.uniform(k6, (1, 3, 200, 1024), dtype=jnp.float32) + 0.5
    out_rag = jax.block_until_ready(diagonal_noise_covariance_forward(x_rag, var_rag))
    ref_rag = x_rag * var_rag
    assert out_rag.shape == ref_rag.shape and out_rag.dtype == ref_rag.dtype
    assert jnp.allclose(out_rag, ref_rag, rtol=1e-6, atol=1e-6)

    # Ragged total (not a multiple of 128): whole-array fallback, no padding copies.
    x_odd = jax.random.normal(k7, (2, 3, 5, 7), dtype=jnp.float32)
    var_odd = jax.random.uniform(k8, (2, 3, 5, 7), dtype=jnp.float32) + 0.5
    out_odd = jax.block_until_ready(diagonal_noise_covariance_forward(x_odd, var_odd))
    ref_odd = x_odd * var_odd
    assert out_odd.shape == ref_odd.shape and out_odd.dtype == ref_odd.dtype
    assert jnp.allclose(out_odd, ref_odd, rtol=1e-6, atol=1e-6)

    print("KERNEL_OK")
</pallas_src>

<mosaic_0001>
module attributes {stable_mosaic.version = 11 : i64} {
  func.func @_sigma_kernel(%arg0: memref<16x128xf32, #tpu.memory_space<vmem>>, %arg1: memref<16x128xf32, #tpu.memory_space<vmem>>, %arg2: memref<16x128xf32, #tpu.memory_space<vmem>>) attributes {dimension_semantics = [], scalar_prefetch = 0 : i64, scratch_operands = 0 : i64, tpu.core_type = #tpu.core_type<tc>} {
    %c0 = arith.constant 0 : index
    %c0_0 = arith.constant 0 : index
    %0 = vector.load %arg0[%c0, %c0_0] : memref<16x128xf32, #tpu.memory_space<vmem>>, vector<16x128xf32>
    %c0_1 = arith.constant 0 : index
    %c0_2 = arith.constant 0 : index
    %1 = vector.load %arg1[%c0_1, %c0_2] : memref<16x128xf32, #tpu.memory_space<vmem>>, vector<16x128xf32>
    %2 = arith.mulf %0, %1 : vector<16x128xf32>
    %c0_3 = arith.constant 0 : index
    %c0_4 = arith.constant 0 : index
    %3 = vector.load %arg2[%c0_3, %c0_4] : memref<16x128xf32, #tpu.memory_space<vmem>>, vector<16x128xf32>
    tpu.vector_store %arg2[%c0_3, %c0_4], %2 {strides = array<i32>} : memref<16x128xf32, #tpu.memory_space<vmem>>, vector<16x128xf32>,
    return
  }
}

</mosaic_0001>

<llo_original>
// kernel: tpu_custom_call.1
$region0: #{tpu_custom_call.1}
  #allocation0 [shape = 'u32[]', space=smem, size = 0x4, offset = 0x4, fixed_abs, tag = 'smem constant byte address 0x4 - core index']
  #allocation1 [shape = 'u32[144,128]{1,0:T(1,128)}', space=vmem, size = 0x12000, scoped, tag = 'internal scratch']
  %s0 = inlined_call_operand.hbm [shape: f32[16,128], index: 0, kind: input, shape index: {}]
  %s1 = inlined_call_operand.hbm [shape: f32[16,128], index: 1, kind: input, shape index: {}]
  %s2 = inlined_call_operand.hbm [shape: f32[16,128], index: 2, kind: output, shape index: {}]
  %s3 = sld [smem:[#allocation0]]
  $region26: #{tpu_custom_call.1} parent=0
    _
  %s5 = ssub.s32 1, %s3
  %s6 = scalar_select 0, %s5, %s3
  $region1: #{tpu_custom_call.1} parent=0
    #allocation2 [shape = 'u8[8192]{0}', space=vmem, size = 0x2000, scoped, tag = 'input window, operand 0, single buffered']
    #allocation3 [shape = 's32[1]{0}', space=sflag, size = 0x4, scoped, tag = 'scoped memory for tpu_custom_call.1']
    #allocation4 [shape = 's32[1]{0}', space=sflag, size = 0x4, scoped, tag = 'scoped memory for tpu_custom_call.1']
    #allocation5 [shape = 'u8[8192]{0}', space=vmem, size = 0x2000, scoped, tag = 'input window, operand 1, single buffered']
    #allocation6 [shape = 's32[1]{0}', space=sflag, size = 0x4, scoped, tag = 'scoped memory for tpu_custom_call.1']
    #allocation7 [shape = 'u8[8192]{0}', space=vmem, size = 0x2000, scoped, tag = 'output window, operand 0, single buffered']
    %7 = vsyncpa [#allocation3], 0
    %8 = vsyncpa [#allocation6], 0
    %9 = vsyncpa [#allocation4], 0
    // Predicated region
    $region2: #{tpu_custom_call.1} parent=1 // pred_check
      _
    $region3: #{tpu_custom_call.1} parent=1 // pred_check_branch
      %11 = sbr.rel (0) target = $region5
    $region4: #{tpu_custom_call.1} parent=1 // pred_region
      %s13 = ssub.s32 256, 256
      %14 = vsyncadd [#allocation3], %s13
      %s15 = sshll.u32 [#allocation2], 4
      %s16 = int_to_ptr.vmem [resolvable:$true] %s15
      %21 = dma.hbm_to_vmem [thread:$0]  %s0, 256, %s16, [#allocation3], 128, 128, 8
    $region5: #{tpu_custom_call.1} parent=1 // pred_fallthru
      _
    // Predicated region
    $region6: #{tpu_custom_call.1} parent=1 // pred_check
      _
    $region7: #{tpu_custom_call.1} parent=1 // pred_check_branch
      %23 = sbr.rel (0) target = $region9
    $region8: #{tpu_custom_call.1} parent=1 // pred_region
      %s25 = ssub.s32 256, 256
      %26 = vsyncadd [#allocation6], %s25
      %s27 = sshll.u32 [#allocation5], 4
      %s28 = int_to_ptr.vmem [resolvable:$true] %s27
      %33 = dma.hbm_to_vmem [thread:$0]  %s1, 256, %s28, [#allocation6], 128, 128, 8
    $region9: #{tpu_custom_call.1} parent=1 // pred_fallthru
      _
    // Predicated region
    $region10: #{tpu_custom_call.1} parent=1 // pred_check
      _
    $region11: #{tpu_custom_call.1} parent=1 // pred_check_branch
      %35 = sbr.rel (0) target = $region13
    $region12: #{tpu_custom_call.1} parent=1 // pred_region
      %36 = dma.done [#allocation3], 256
    $region13: #{tpu_custom_call.1} parent=1 // pred_fallthru
      _
    // Predicated region
    $region14: #{tpu_custom_call.1} parent=1 // pred_check
      _
    $region15: #{tpu_custom_call.1} parent=1 // pred_check_branch
      %38 = sbr.rel (0) target = $region17
    $region16: #{tpu_custom_call.1} parent=1 // pred_region
      %39 = dma.done [#allocation6], 256
    $region17: #{tpu_custom_call.1} parent=1 // pred_fallthru
      _
    %v40 = vld [vmem:[#allocation2] sm:$0xff]
    %v41 = vld [vmem:[#allocation2 + $0x8] sm:$0xff]
    %v42 = vld [vmem:[#allocation5] sm:$0xff]
    %v43 = vld [vmem:[#allocation5 + $0x8] sm:$0xff]
    %v44 = vmul.f32 %v40, %v42
    %v45 = vmul.f32 %v41, %v43
    %46 = vst [vmem:[#allocation7] sm:$0xff] %v44
    %47 = vst [vmem:[#allocation7 + $0x8] sm:$0xff] %v45
    // Predicated region
    $region18: #{tpu_custom_call.1} parent=1 // pred_check
      _
    $region19: #{tpu_custom_call.1} parent=1 // pred_check_branch
      %49 = sbr.rel (0) target = $region21
    $region20: #{tpu_custom_call.1} parent=1 // pred_region
      %s51 = ssub.s32 256, 256
      %52 = vsyncadd [#allocation4], %s51
      %s53 = sshll.u32 [#allocation7], 4
      %s54 = int_to_ptr.vmem [resolvable:$true] %s53
      %59 = dma.vmem_to_hbm [thread:$0]  %s54, 256, %s2, [#allocation4], 128, 128, 8
    $region21: #{tpu_custom_call.1} parent=1 // pred_fallthru
      _
    // Predicated region
    $region22: #{tpu_custom_call.1} parent=1 // pred_check
      _
    $region23: #{tpu_custom_call.1} parent=1 // pred_check_branch
      %61 = sbr.rel (0) target = $region25
    $region24: #{tpu_custom_call.1} parent=1 // pred_region
      %62 = dma.done [#allocation4], 256
    $region25: #{tpu_custom_call.1} parent=1 // pred_fallthru
      _
    %63 = vsyncpa [#allocation3], 1
    %64 = vsyncpa [#allocation6], 1
    %65 = vsyncpa [#allocation4], 1

</llo_original>
